<compile_context>
chip_gen: v6e
topology: v6e:2x2x1
jax: 0.10.0
libtpu: 0.0.40
codegen_flags: <defaults>
</compile_context>

<pallas_src>
import jax
import jax.numpy as jnp
from jax.experimental import pallas as pl
from jax.experimental.pallas import tpu as pltpu

_TARGET_BLOCK_BYTES = 2 * 1024 * 1024  # ~2 MiB blocks: good on v7x, fine on v5e/v6e


def _add10_kernel(x_ref, o_ref):
    # Whole-tile elementwise add on the VPU.
    o_ref[...] = x_ref[...] + jnp.asarray(10, dtype=x_ref.dtype)


def _add10_2d(x2d: jax.Array) -> jax.Array:
    """Run the elementwise +10 kernel over a lane-dense (rows, lanes) slab."""
    rows, lanes = x2d.shape
    itemsize = jnp.dtype(x2d.dtype).itemsize

    # Row-block size targeting ~_TARGET_BLOCK_BYTES per block, multiple of 8.
    tm = max(8, (_TARGET_BLOCK_BYTES // (lanes * itemsize)) // 8 * 8)
    if tm >= rows:
        tm = rows  # full-extent block (always legal, even if rows % 8 != 0)

    block_bytes = tm * lanes * itemsize
    # in + out, double-buffered => 4x block; generous headroom, still well
    # under v7x's 64 MiB physical VMEM.
    vmem_limit = min(64 * 1024 * 1024, max(32 * 1024 * 1024, 8 * block_bytes))

    grid = (pl.cdiv(rows, tm),)
    return pl.pallas_call(
        _add10_kernel,
        out_shape=jax.ShapeDtypeStruct((rows, lanes), x2d.dtype),
        grid_spec=pltpu.PrefetchScalarGridSpec(
            num_scalar_prefetch=0,
            grid=grid,
            in_specs=[pl.BlockSpec((tm, lanes), lambda i: (i, 0))],
            out_specs=pl.BlockSpec((tm, lanes), lambda i: (i, 0)),
        ),
        compiler_params=pltpu.CompilerParams(
            dimension_semantics=("parallel",),
            vmem_limit_bytes=vmem_limit,
        ),
    )(x2d)


def my_module_forward(x: jax.Array, use_memory_efficient: bool = False) -> jax.Array:
    """Equivalent of MyModule(use_memory_efficient).forward(x): returns x + 10."""
    del use_memory_efficient  # both branches compute x + 10
    orig_shape = x.shape
    dtype = x.dtype
    n = x.size

    # Pick the widest lane-dense last dim that divides the element count.
    lanes = None
    for cand in (2048, 1024, 512, 256, 128):
        if n % cand == 0:
            lanes = cand
            break

    if lanes is not None:
        # Common path: pure metadata reshape, no pad / slice copies.
        rows = n // lanes
        y2d = _add10_2d(jnp.reshape(x, (rows, lanes)))
        return jnp.reshape(y2d, orig_shape)

    # Rare fallback: element count not a multiple of 128.  Process the
    # 128-aligned bulk with the kernel and the <128-element tail with jnp.
    x_flat = jnp.reshape(x, (-1,))
    lanes = 128
    n_main = (n // lanes) * lanes
    if n_main == 0:
        return jnp.reshape(x_flat + jnp.asarray(10, dtype), orig_shape)
    rows = n_main // lanes
    y_main = _add10_2d(jnp.reshape(x_flat[:n_main], (rows, lanes)))
    y_tail = x_flat[n_main:] + jnp.asarray(10, dtype)
    y_flat = jnp.concatenate([jnp.reshape(y_main, (-1,)), y_tail])
    return jnp.reshape(y_flat, orig_shape)


if __name__ == "__main__":
    key = jax.random.PRNGKey(0)
    # Small NCHW-style input consistent with the module: batch=2, channels=4, 16x16.
    x = jax.random.normal(key, (2, 4, 16, 16), dtype=jnp.float32)

    y = my_module_forward(x, use_memory_efficient=True)
    y = jax.block_until_ready(y)

    expected = x + 10.0
    assert y.shape == x.shape and y.dtype == x.dtype
    assert jnp.allclose(y, expected, atol=1e-6), "mismatch vs reference"

    print("KERNEL_OK")
</pallas_src>

<mosaic_0001>
module attributes {stable_mosaic.version = 11 : i64} {
  func.func @_add10_kernel(%arg0: i32, %arg1: memref<1x2048xf32, #tpu.memory_space<vmem>>, %arg2: memref<1x2048xf32, #tpu.memory_space<vmem>>) attributes {dimension_semantics = [#tpu.dimension_semantics<parallel>], iteration_bounds = array<i64: 1>, scalar_prefetch = 0 : i64, scratch_operands = 0 : i64, tpu.core_type = #tpu.core_type<tc>, window_params = [{transform_indices = @transform_0, window_bounds = array<i64: 1, 2048>}, {transform_indices = @transform_1, window_bounds = array<i64: 1, 2048>}]} {
    %c0 = arith.constant 0 : index
    %c0_0 = arith.constant 0 : index
    %0 = vector.load %arg1[%c0, %c0_0] : memref<1x2048xf32, #tpu.memory_space<vmem>>, vector<1x2048xf32>
    %cst = arith.constant 1.000000e+01 : f32
    %1 = vector.broadcast %cst : f32 to vector<1x2048xf32>
    %2 = arith.addf %0, %1 : vector<1x2048xf32>
    %c0_1 = arith.constant 0 : index
    %c0_2 = arith.constant 0 : index
    %3 = vector.load %arg2[%c0_1, %c0_2] : memref<1x2048xf32, #tpu.memory_space<vmem>>, vector<1x2048xf32>
    tpu.vector_store %arg2[%c0_1, %c0_2], %2 {strides = array<i32>} : memref<1x2048xf32, #tpu.memory_space<vmem>>, vector<1x2048xf32>,
    return
  }
  func.func @transform_0(%arg0: i32) -> (i32, i32) {
    %c0_i32 = arith.constant 0 : i32
    %c0_i32_0 = arith.constant 0 : i32
    return %arg0, %c0_i32 : i32, i32
  }
  func.func @transform_1(%arg0: i32) -> (i32, i32) {
    %c0_i32 = arith.constant 0 : i32
    %c0_i32_0 = arith.constant 0 : i32
    return %arg0, %c0_i32 : i32, i32
  }
}

</mosaic_0001>

<llo_original>
// kernel: tpu_custom_call.1
$region0: #{tpu_custom_call.1}
  #allocation0 [shape = 'u32[]', space=smem, size = 0x4, offset = 0x4, fixed_abs, tag = 'smem constant byte address 0x4 - core index']
  #allocation1 [shape = 'u32[144,128]{1,0:T(1,128)}', space=vmem, size = 0x12000, scoped, tag = 'internal scratch']
  %s0 = inlined_call_operand.hbm [shape: f32[1,2048], index: 0, kind: input, shape index: {}]
  %s1 = inlined_call_operand.hbm [shape: f32[1,2048], index: 1, kind: output, shape index: {}]
  %s2 = sld [smem:[#allocation0]]
  $region18: #{tpu_custom_call.1} parent=0
    _
  %s4 = ssub.s32 1, %s2
  %s5 = scalar_select 0, %s4, %s2
  $region1: #{tpu_custom_call.1} parent=0
    #allocation2 [shape = 'u8[8192]{0}', space=vmem, size = 0x2000, scoped, tag = 'input window, operand 0, single buffered']
    #allocation3 [shape = 's32[1]{0}', space=sflag, size = 0x4, scoped, tag = 'scoped memory for tpu_custom_call.1']
    #allocation4 [shape = 's32[1]{0}', space=sflag, size = 0x4, scoped, tag = 'scoped memory for tpu_custom_call.1']
    #allocation5 [shape = 'u8[8192]{0}', space=vmem, size = 0x2000, scoped, tag = 'output window, operand 0, single buffered']
    %6 = vsyncpa [#allocation3], 0
    %7 = vsyncpa [#allocation4], 0
    // Predicated region
    $region2: #{tpu_custom_call.1} parent=1 // pred_check
      _
    $region3: #{tpu_custom_call.1} parent=1 // pred_check_branch
      %9 = sbr.rel (0) target = $region5
    $region4: #{tpu_custom_call.1} parent=1 // pred_region
      %s11 = ssub.s32 256, 256
      %12 = vsyncadd [#allocation3], %s11
      %s14 = sshll.u32 [#allocation2], 4
      %s15 = int_to_ptr.vmem [resolvable:$true] %s14
      %17 = dma.hbm_to_vmem [thread:$0]  %s0, 256, %s15, [#allocation3]
    $region5: #{tpu_custom_call.1} parent=1 // pred_fallthru
      _
    // Predicated region
    $region6: #{tpu_custom_call.1} parent=1 // pred_check
      _
    $region7: #{tpu_custom_call.1} parent=1 // pred_check_branch
      %19 = sbr.rel (0) target = $region9
    $region8: #{tpu_custom_call.1} parent=1 // pred_region
      %20 = dma.done [#allocation3], 256
    $region9: #{tpu_custom_call.1} parent=1 // pred_fallthru
      _
    %v21 = vld [vmem:[#allocation2] sm:$0xff]
    %v22 = vld [vmem:[#allocation2 + $0x8] sm:$0xff]
    %v23 = vadd.f32 %v21, 10.0
    %v24 = vadd.f32 %v22, 10.0
    %25 = vst [vmem:[#allocation5] sm:$0xff] %v23
    %26 = vst [vmem:[#allocation5 + $0x8] sm:$0xff] %v24
    // Predicated region
    $region10: #{tpu_custom_call.1} parent=1 // pred_check
      _
    $region11: #{tpu_custom_call.1} parent=1 // pred_check_branch
      %28 = sbr.rel (0) target = $region13
    $region12: #{tpu_custom_call.1} parent=1 // pred_region
      %s30 = ssub.s32 256, 256
      %31 = vsyncadd [#allocation4], %s30
      %s33 = sshll.u32 [#allocation5], 4
      %s34 = int_to_ptr.vmem [resolvable:$true] %s33
      %36 = dma.vmem_to_hbm [thread:$0]  %s34, 256, %s1, [#allocation4]
    $region13: #{tpu_custom_call.1} parent=1 // pred_fallthru
      _
    // Predicated region
    $region14: #{tpu_custom_call.1} parent=1 // pred_check
      _
    $region15: #{tpu_custom_call.1} parent=1 // pred_check_branch
      %38 = sbr.rel (0) target = $region17
    $region16: #{tpu_custom_call.1} parent=1 // pred_region
      %39 = dma.done [#allocation4], 256
    $region17: #{tpu_custom_call.1} parent=1 // pred_fallthru
      _
    %40 = vsyncpa [#allocation3], 1
    %41 = vsyncpa [#allocation4], 1

</llo_original>
